<compile_context>
chip_gen: v7x
topology: tpu7x:2x2x1
jax: 0.10.0
libtpu: 0.0.40
codegen_flags: <defaults>
</compile_context>

<pallas_src>
import jax
import jax.numpy as jnp
from jax.experimental import pallas as pl
from jax.experimental.pallas import tpu as pltpu


def _vmem_capacity_bytes():
    try:
        return int(pltpu.get_tpu_info().vmem_capacity_bytes)
    except Exception:
        return 64 * 1024 * 1024                    # conservative: assume v7x


_VMEM_CAP = _vmem_capacity_bytes()
if _VMEM_CAP >= 128 * 1024 * 1024:                 # v5e / v6e (128 MiB VMEM)
    _TARGET_BLOCK_BYTES = 16 * 1024 * 1024
    _VMEM_LIMIT_BYTES = 96 * 1024 * 1024
else:                                              # v7x (64 MiB VMEM)
    _TARGET_BLOCK_BYTES = 8 * 1024 * 1024
    _VMEM_LIMIT_BYTES = 48 * 1024 * 1024

# Ragged (n % 128 != 0) path: modest blocks so even a pessimistic layout of a
# 1-row tile stays far below the VMEM limit on every generation.
_RAGGED_BLOCK_BYTES = 1 * 1024 * 1024

_COLS_CHOICES = (2048, 1024, 512, 256, 128)        # lane-dense column counts


def _copy_kernel(x_ref, o_ref):
    # Pure pass-through: copy the VMEM input tile to the output tile.
    o_ref[...] = x_ref[...]


def _pallas_copy(x2d, block_shape, grid, index_map, n_bytes):
    return pl.pallas_call(
        _copy_kernel,
        out_shape=jax.ShapeDtypeStruct(x2d.shape, x2d.dtype),
        grid_spec=pltpu.PrefetchScalarGridSpec(
            num_scalar_prefetch=0,
            grid=grid,
            in_specs=[pl.BlockSpec(block_shape, index_map)],
            out_specs=pl.BlockSpec(block_shape, index_map),
        ),
        compiler_params=pltpu.CompilerParams(
            dimension_semantics=("parallel",),
            vmem_limit_bytes=_VMEM_LIMIT_BYTES,
        ),
        cost_estimate=pl.CostEstimate(
            flops=0,
            transcendentals=0,
            bytes_accessed=2 * n_bytes,            # exact: read N + write N
        ),
    )(x2d)


def _sublane_tile(itemsize):
    # Packed sublane tile: f32 -> 8, bf16 -> 16, int8/fp8 -> 32.
    return max(8, 32 // itemsize)


@jax.jit
def identity(x):
    """Identity forward pass implemented as a Pallas TPU copy kernel."""
    orig_shape = x.shape
    n = x.size
    if n == 0:
        return x

    itemsize = jnp.dtype(x.dtype).itemsize
    n_bytes = n * itemsize
    flat = x.reshape(-1)

    cols = next((c for c in _COLS_CHOICES if n % c == 0), None)

    if cols is not None:
        # Lane-dense 2D view: full-width blocks, unmasked vst, large DMAs.
        rows = n // cols
        sub = _sublane_tile(itemsize)
        tile_r = max(sub, (_TARGET_BLOCK_BYTES // (cols * itemsize)) // sub * sub)
        if rows > sub:
            # Give the ("parallel",) grid >= 2 steps so both v7x TensorCores
            # get work (no cost on 1-TC v5e/v6e).
            half = pl.cdiv(pl.cdiv(rows, 2), sub) * sub
            tile_r = min(tile_r, half)
        tile_r = min(tile_r, rows)                 # full extent is always legal
        x2d = flat.reshape(rows, cols)
        out = _pallas_copy(
            x2d,
            (tile_r, cols),
            (pl.cdiv(rows, tile_r),),
            lambda i: (i, 0),
            n_bytes,
        )
    else:
        # Size not divisible by 128: ragged grid over a (1, n) view.  Pallas
        # masks the partial final block, so no pad / slice HBM passes.
        block_c = max(128, (_RAGGED_BLOCK_BYTES // itemsize) // 128 * 128)
        if n <= block_c:
            block_c = n                            # single full-extent block
        x2d = flat.reshape(1, n)
        out = _pallas_copy(
            x2d,
            (1, block_c),
            (pl.cdiv(n, block_c),),
            lambda i: (0, i),
            n_bytes,
        )

    return out.reshape(orig_shape)


if __name__ == "__main__":
    key = jax.random.PRNGKey(0)
    # Small NCHW-like input consistent with a typical conv-net tensor.
    x = jax.random.normal(key, (2, 4, 16, 16), dtype=jnp.float32)

    y = identity(x)
    jax.block_until_ready(y)

    assert y.shape == x.shape, (y.shape, x.shape)
    assert y.dtype == x.dtype, (y.dtype, x.dtype)
    assert bool(jnp.all(y == x)), "identity output mismatch"

    print("KERNEL_OK")
</pallas_src>

<mosaic_0001>
module attributes {stable_mosaic.version = 11 : i64} {
  func.func @_copy_kernel(%arg0: i32, %arg1: memref<1x2048xf32, #tpu.memory_space<vmem>>, %arg2: memref<1x2048xf32, #tpu.memory_space<vmem>>) attributes {dimension_semantics = [#tpu.dimension_semantics<parallel>], iteration_bounds = array<i64: 1>, scalar_prefetch = 0 : i64, scratch_operands = 0 : i64, tpu.core_type = #tpu.core_type<tc>, window_params = [{transform_indices = @transform_0, window_bounds = array<i64: 1, 2048>}, {transform_indices = @transform_1, window_bounds = array<i64: 1, 2048>}]} {
    %c0 = arith.constant 0 : index
    %c0_0 = arith.constant 0 : index
    %0 = vector.load %arg1[%c0, %c0_0] : memref<1x2048xf32, #tpu.memory_space<vmem>>, vector<1x2048xf32>
    %c0_1 = arith.constant 0 : index
    %c0_2 = arith.constant 0 : index
    %1 = vector.load %arg2[%c0_1, %c0_2] : memref<1x2048xf32, #tpu.memory_space<vmem>>, vector<1x2048xf32>
    tpu.vector_store %arg2[%c0_1, %c0_2], %0 {strides = array<i32>} : memref<1x2048xf32, #tpu.memory_space<vmem>>, vector<1x2048xf32>,
    return
  }
  func.func @transform_0(%arg0: i32) -> (i32, i32) {
    %c0_i32 = arith.constant 0 : i32
    %c0_i32_0 = arith.constant 0 : i32
    return %arg0, %c0_i32 : i32, i32
  }
  func.func @transform_1(%arg0: i32) -> (i32, i32) {
    %c0_i32 = arith.constant 0 : i32
    %c0_i32_0 = arith.constant 0 : i32
    return %arg0, %c0_i32 : i32, i32
  }
}

</mosaic_0001>

<llo_original>
// kernel: identity.1
$region0: #{identity.1}
  #allocation0 [shape = 'u32[]', space=smem, size = 0x4, offset = 0x4, fixed_abs, tag = 'smem constant byte address 0x4 - core index']
  #allocation1 [shape = 'u32[144,128]{1,0:T(1,128)}', space=vmem, size = 0x12000, scoped, tag = 'internal scratch']
  %s0 = inlined_call_operand.vmem [shape: f32[1,2048], index: 0, kind: input, shape index: {}]
  %s1 = inlined_call_operand.vmem [shape: f32[1,2048], index: 1, kind: output, shape index: {}]
  %s2 = sld [smem:[#allocation0]]
  $region14: #{identity.1} parent=0
    _
  %s4 = ssub.s32 1, %s2
  %s5 = scalar_select 0, %s4, %s2
  // Predicated region
  $region2: #{identity.1} parent=0 // pred_check
    _
  $region3: #{identity.1} parent=0 // pred_check_branch
    %7 = sbr.rel (0) target = $region5
  $region4: #{identity.1} parent=0 // pred_region
    _
  $region5: #{identity.1} parent=0 // pred_fallthru
    _
  %v8 = vld [vmem:[%s0] sm:$0xff]
  %v9 = vld [vmem:[%s0 + $0x8] sm:$0xff]
  %10 = vst [vmem:[%s1] sm:$0xff] %v8
  %11 = vst [vmem:[%s1 + $0x8] sm:$0xff] %v9
  // Predicated region
  $region6: #{identity.1} parent=0 // pred_check
    _
  $region7: #{identity.1} parent=0 // pred_check_branch
    %13 = sbr.rel (0) target = $region9
  $region8: #{identity.1} parent=0 // pred_region
    _
  $region9: #{identity.1} parent=0 // pred_fallthru
    _
  // Predicated region
  $region10: #{identity.1} parent=0 // pred_check
    _
  $region11: #{identity.1} parent=0 // pred_check_branch
    %15 = sbr.rel (0) target = $region13
  $region12: #{identity.1} parent=0 // pred_region
    _
  $region13: #{identity.1} parent=0 // pred_fallthru
    _

</llo_original>
